<compile_context>
chip_gen: v5e
topology: v5e:2x2
jax: 0.10.0
libtpu: 0.0.40
codegen_flags: <defaults>
</compile_context>

<pallas_src>
import functools
import math

import jax
import jax.numpy as jnp
from jax import lax
from jax.experimental import pallas as pl
from jax.experimental.pallas import tpu as pltpu

# MXU operand dtype (accumulation is always f32 via preferred_element_type).
MM_DTYPE = jnp.bfloat16


def _default_vmem_limit():
    """Generation-aware scoped-VMEM budget (v7x: 64 MiB/TC physical; v5e/v6e: 128 MiB)."""
    try:
        cap = getattr(pltpu.get_tpu_info(), "vmem_capacity_bytes", None)
        if cap:
            return int(min(cap * 3 // 4, 100 * 1024 * 1024))
    except Exception:
        pass
    return 48 * 1024 * 1024


VMEM_LIMIT_BYTES = _default_vmem_limit()


def _pick_tile(dim, pref):
    """Largest tile <= pref that divides dim (falls back to the full extent, which
    always satisfies the (8,128) blocking rule at small demo shapes)."""
    t = min(pref, dim)
    while t > 8 and dim % t:
        t //= 2
    return t if dim % t == 0 else dim


# -----------------------------------------------------------------------------
# Tiled linear (+ optional fused rotary-embedding epilogue)
# -----------------------------------------------------------------------------
def _matmul_accumulate(x_ref, w_ref, acc_ref):
    @pl.when(pl.program_id(2) == 0)
    def _():
        acc_ref[...] = jnp.zeros_like(acc_ref)

    acc_ref[...] += jnp.dot(
        x_ref[...].astype(MM_DTYPE), w_ref[...].astype(MM_DTYPE),
        preferred_element_type=jnp.float32)


def _linear_kernel(x_ref, w_ref, b_ref, o_ref, acc_ref):
    _matmul_accumulate(x_ref, w_ref, acc_ref)

    @pl.when(pl.program_id(2) == pl.num_programs(2) - 1)
    def _():
        o_ref[...] = (acc_ref[...] + b_ref[...]).astype(o_ref.dtype)


def _linear_rope_kernel(x_ref, w_ref, b_ref, cos_ref, ssin_ref, o_ref, acc_ref, *, tn):
    _matmul_accumulate(x_ref, w_ref, acc_ref)

    @pl.when(pl.program_id(2) == pl.num_programs(2) - 1)
    def _():
        y = acc_ref[...] + b_ref[...]                       # (tm, tn) f32 epilogue
        # Interleaved-pair RoPE (torchtune convention) fused into the epilogue:
        #   out[2i]   = y[2i]  *cos_i - y[2i+1]*sin_i
        #   out[2i+1] = y[2i+1]*cos_i + y[2i]  *sin_i
        # Adjacent-lane swap via two XLU rolls + a lane-parity select (VPU);
        # cos / (±sin) tables are precomputed (bf16 in HBM, upcast here).
        up = pltpu.roll(y, shift=tn - 1, axis=1)            # up[j] = y[j+1]
        dn = pltpu.roll(y, shift=1, axis=1)                 # dn[j] = y[j-1]
        lane = lax.broadcasted_iota(jnp.int32, y.shape, 1)
        swapped = jnp.where(lane % 2 == 0, up, dn)
        y = (y * cos_ref[...].astype(jnp.float32)
             + swapped * ssin_ref[...].astype(jnp.float32))
        o_ref[...] = y.astype(o_ref.dtype)


def pallas_linear(x2d, w_t, b, rope=None, seq_len=None, out_dtype=None,
                  tm_pref=512, tn_pref=512, tk_pref=512):
    """y = x @ W^T + b (W^T given as (Din, Dout), bf16) as a tiled, pipelined Pallas
    matmul with bf16 MXU operands and f32 accumulation.  If rope=(cos, ssin) tables of
    shape (max_seq, Dout) are given, the interleaved rotary embedding is applied in the
    epilogue (rows of x2d are (batch*seq))."""
    M, K = x2d.shape
    N = w_t.shape[1]
    b2 = b.reshape(1, N).astype(jnp.float32)
    out_dtype = out_dtype or x2d.dtype

    tn = _pick_tile(N, tn_pref)
    tk = _pick_tile(K, tk_pref)

    if rope is None:
        tm = _pick_tile(M, tm_pref)
        kernel = _linear_kernel
        in_specs = [
            pl.BlockSpec((tm, tk), lambda m, n, k: (m, k)),
            pl.BlockSpec((tk, tn), lambda m, n, k: (k, n)),
            pl.BlockSpec((1, tn), lambda m, n, k: (0, n)),
        ]
        args = (x2d, w_t, b2)
    else:
        assert seq_len is not None and M % seq_len == 0
        assert tn % 2 == 0
        tm = _pick_tile(seq_len, min(tm_pref, seq_len))      # tm | seq_len  =>  tm | M
        s_blocks = seq_len // tm
        cos_t, ssin_t = rope
        kernel = functools.partial(_linear_rope_kernel, tn=tn)
        in_specs = [
            pl.BlockSpec((tm, tk), lambda m, n, k: (m, k)),
            pl.BlockSpec((tk, tn), lambda m, n, k: (k, n)),
            pl.BlockSpec((1, tn), lambda m, n, k: (0, n)),
            pl.BlockSpec((tm, tn), lambda m, n, k: (m % s_blocks, n)),
            pl.BlockSpec((tm, tn), lambda m, n, k: (m % s_blocks, n)),
        ]
        args = (x2d, w_t, b2, cos_t, ssin_t)

    grid = (M // tm, N // tn, K // tk)
    return pl.pallas_call(
        kernel,
        out_shape=jax.ShapeDtypeStruct((M, N), out_dtype),
        grid_spec=pltpu.PrefetchScalarGridSpec(
            num_scalar_prefetch=0,
            grid=grid,
            in_specs=in_specs,
            out_specs=pl.BlockSpec((tm, tn), lambda m, n, k: (m, n)),
            scratch_shapes=[pltpu.VMEM((tm, tn), jnp.float32)],
        ),
        compiler_params=pltpu.CompilerParams(
            dimension_semantics=("parallel", "parallel", "arbitrary"),
            vmem_limit_bytes=VMEM_LIMIT_BYTES,
        ),
    )(*args)


# -----------------------------------------------------------------------------
# Flash-tiled power-law-graph attention with cached metric tensor G
# (native (B, S, d_model) layout, heads folded into each grid step)
# -----------------------------------------------------------------------------
def _plga_flash_kernel(q_ref, k_ref, v_ref, g_ref, o_ref,
                       qg_ref, m_ref, l_ref, acc_ref,
                       *, tq, tk, num_heads, depth, causal):
    qi = pl.program_id(1)
    ki = pl.program_id(2)
    nk = pl.num_programs(2)

    @pl.when(ki == 0)
    def _init():
        m_ref[...] = jnp.full(m_ref.shape, -jnp.inf, jnp.float32)
        l_ref[...] = jnp.zeros_like(l_ref)
        acc_ref[...] = jnp.zeros_like(acc_ref)
        # Fold the pre-scaled metric tensor (G / sqrt(dh)) into q once per q tile.
        for h in range(num_heads):
            qg_ref[h] = jnp.dot(
                q_ref[:, h * depth:(h + 1) * depth].astype(MM_DTYPE),
                g_ref[h].astype(MM_DTYPE),
                preferred_element_type=jnp.float32)

    def _compute():
        if causal:
            row = qi * tq + lax.broadcasted_iota(jnp.int32, (tq, tk), 0)
            col = ki * tk + lax.broadcasted_iota(jnp.int32, (tq, tk), 1)
            neg = jnp.where(col > row, jnp.float32(-1e9), jnp.float32(0.0))
        for h in range(num_heads):
            k_h = k_ref[:, h * depth:(h + 1) * depth].astype(MM_DTYPE)   # (tk, dh)
            v_h = v_ref[:, h * depth:(h + 1) * depth].astype(MM_DTYPE)   # (tk, dh)
            # logits = (q G / sqrt(dh)) @ k^T -- contract last dims, no k.T copy
            s = lax.dot_general(
                qg_ref[h].astype(MM_DTYPE), k_h,
                dimension_numbers=(((1,), (1,)), ((), ())),
                preferred_element_type=jnp.float32)                      # (tq, tk)
            if causal:
                s = s + neg
            m_prev = m_ref[h]
            m_new = jnp.maximum(m_prev, jnp.max(s, axis=-1, keepdims=True))
            alpha = jnp.exp(m_prev - m_new)
            p = jnp.exp(s - m_new)
            l_ref[h] = alpha * l_ref[h] + jnp.sum(p, axis=-1, keepdims=True)
            acc_ref[h] = alpha * acc_ref[h] + jnp.dot(
                p.astype(MM_DTYPE), v_h, preferred_element_type=jnp.float32)
            m_ref[h] = m_new

    if causal:
        # Skip kv tiles that lie entirely above the diagonal for this q tile
        # (their K/V DMAs are also elided by the clamped index_map).
        pl.when(ki * tk <= qi * tq + (tq - 1))(_compute)
    else:
        _compute()

    @pl.when(ki == nk - 1)
    def _finalize():
        # Exact normalization; write the merged-head, lane-dense (tq, d_model) slab.
        for h in range(num_heads):
            out_h = acc_ref[h] * pl.reciprocal(l_ref[h], approx=False)
            o_ref[:, h * depth:(h + 1) * depth] = out_h.astype(o_ref.dtype)


def pallas_plga_attention(q, k, v, g_scaled, num_heads, *, causal=True,
                          tq_pref=256, tk_pref=512):
    """q, k, v: (B, S, d_model) in native projection layout (no transposes);
    g_scaled: (H, dh, dh) already divided by sqrt(dh).
    Returns the merged-head output (B, S, d_model)."""
    B, S, d_model = q.shape
    depth = d_model // num_heads
    tq = _pick_tile(S, tq_pref)
    tk = _pick_tile(S, tk_pref)

    q_spec = pl.BlockSpec((None, tq, d_model), lambda b, i, j: (b, i, 0))

    def kv_index(b, i, j):
        if causal:
            # Clamp so fully-masked kv tiles repeat the previous block index,
            # letting Pallas elide the K/V DMA for skipped (upper-triangular) steps.
            j = jnp.minimum(j, (i * tq + (tq - 1)) // tk)
        return (b, j, 0)

    kv_spec = pl.BlockSpec((None, tk, d_model), kv_index)
    g_spec = pl.BlockSpec((num_heads, depth, depth), lambda b, i, j: (0, 0, 0))
    out_spec = pl.BlockSpec((None, tq, d_model), lambda b, i, j: (b, i, 0))

    kernel = functools.partial(_plga_flash_kernel, tq=tq, tk=tk,
                               num_heads=num_heads, depth=depth, causal=causal)
    return pl.pallas_call(
        kernel,
        out_shape=jax.ShapeDtypeStruct((B, S, d_model), q.dtype),
        grid_spec=pltpu.PrefetchScalarGridSpec(
            num_scalar_prefetch=0,
            grid=(B, S // tq, S // tk),
            in_specs=[q_spec, kv_spec, kv_spec, g_spec],
            out_specs=out_spec,
            scratch_shapes=[
                pltpu.VMEM((num_heads, tq, depth), jnp.float32),  # q @ (G/sqrt(dh))
                pltpu.VMEM((num_heads, tq, 1), jnp.float32),      # running max
                pltpu.VMEM((num_heads, tq, 1), jnp.float32),      # running denom
                pltpu.VMEM((num_heads, tq, depth), jnp.float32),  # output accumulator
            ],
        ),
        compiler_params=pltpu.CompilerParams(
            # (B, S/tq) are parallel (keeps >=2 independent units for v7x's 2 TCs),
            # kv axis is the sequential reduction.
            dimension_semantics=("parallel", "parallel", "arbitrary"),
            vmem_limit_bytes=VMEM_LIMIT_BYTES,
        ),
    )(q, k, v, g_scaled)


# -----------------------------------------------------------------------------
# Rotary-embedding tables (torchtune interleaved-pair convention), expanded to
# full d_model width, stored bf16 (upcast to f32 in the fused epilogue).
# -----------------------------------------------------------------------------
def build_rope_tables(max_seq_len, head_dim, d_model, base=10000.0, dtype=jnp.bfloat16):
    theta = 1.0 / (base ** (jnp.arange(0, head_dim, 2, dtype=jnp.float32) / head_dim))
    pos = jnp.arange(max_seq_len, dtype=jnp.float32)
    ang = jnp.outer(pos, theta)                                   # (S, half)
    cos = jnp.repeat(jnp.cos(ang), 2, axis=-1)                    # [c0,c0,c1,c1,...]
    sin = jnp.sin(ang)
    ssin = jnp.stack([-sin, sin], axis=-1).reshape(max_seq_len, head_dim)  # [-s0,+s0,...]
    n_heads = d_model // head_dim
    return (jnp.tile(cos, (1, n_heads)).astype(dtype),
            jnp.tile(ssin, (1, n_heads)).astype(dtype))           # (S, d_model)


# -----------------------------------------------------------------------------
# Parameter init (deterministic, in-script); weights stored bf16 for the MXU.
# -----------------------------------------------------------------------------
def xavier_uniform(key, fan_in, fan_out, dtype=jnp.float32):
    limit = math.sqrt(6.0 / (fan_in + fan_out))
    # stored as (fan_in, fan_out) == W^T relative to torch's (out, in)
    return jax.random.uniform(key, (fan_in, fan_out), jnp.float32,
                              -limit, limit).astype(dtype)


def init_params(key, d_model, num_heads):
    depth = d_model // num_heads
    ks = jax.random.split(key, 5)
    return {
        "wq_w": xavier_uniform(ks[0], d_model, d_model, MM_DTYPE),
        "wq_b": jnp.zeros((d_model,), jnp.float32),
        "wk_w": xavier_uniform(ks[1], d_model, d_model, MM_DTYPE),
        "wk_b": jnp.zeros((d_model,), jnp.float32),
        "wv_w": xavier_uniform(ks[2], d_model, d_model, MM_DTYPE),
        "wv_b": jnp.zeros((d_model,), jnp.float32),
        "dense_w": xavier_uniform(ks[3], d_model, d_model, MM_DTYPE),
        "dense_b": jnp.zeros((d_model,), jnp.float32),
        # cached metric tensor G (per head, depth x depth)
        "Gcache": 0.1 * jax.random.normal(ks[4], (num_heads, depth, depth), jnp.float32),
    }


# -----------------------------------------------------------------------------
# Forward pass (mirrors plgMultiHeadAttention.forward, kvcache=None path)
# -----------------------------------------------------------------------------
def plg_mha_forward(params, q, k, v, mask, num_heads, rope_tables):
    B, S, d_model = q.shape
    depth = d_model // num_heads
    cos_t, ssin_t = rope_tables   # (max_seq_len, d_model) bf16; only rows [0, S) used

    # TODO(synk): `mask` is accepted for API fidelity; the standard PLDR-LLM look-ahead
    # mask is generated in-kernel (broadcasted_iota) to avoid the S^2 HBM mask read.
    # Arbitrary/padding masks would need an extra mask BlockSpec path.
    del mask

    # fused projection + bias (+ rotary epilogue for q, k) — Pallas tiled matmuls.
    # Outputs (== kv-cache and attention operands) are bf16.
    qr = pallas_linear(q.reshape(B * S, d_model), params["wq_w"], params["wq_b"],
                       rope=(cos_t, ssin_t), seq_len=S, out_dtype=MM_DTYPE)
    kr = pallas_linear(k.reshape(B * S, d_model), params["wk_w"], params["wk_b"],
                       rope=(cos_t, ssin_t), seq_len=S, out_dtype=MM_DTYPE)
    vp = pallas_linear(v.reshape(B * S, d_model), params["wv_w"], params["wv_b"],
                       out_dtype=MM_DTYPE)

    # kv-cache is just a view of the projection outputs (RoPE already applied to k),
    # stored in (B, S, H, depth) as in the PyTorch code — no extra pass.
    kvcache = [kr.reshape(B, S, num_heads, depth), vp.reshape(B, S, num_heads, depth)]

    # fold 1/sqrt(depth) into the cached metric tensor once (removes per-tile divide)
    g_scaled = (params["Gcache"] * (1.0 / math.sqrt(depth))).astype(MM_DTYPE)

    # attention on the native (B, S, d_model) layout — no transposes anywhere.
    hnext = pallas_plga_attention(qr.reshape(B, S, d_model),
                                  kr.reshape(B, S, d_model),
                                  vp.reshape(B, S, d_model),
                                  g_scaled, num_heads, causal=True)

    # final dense consumes the merged-head slab directly (tiled Pallas matmul).
    out = pallas_linear(hnext.reshape(B * S, d_model), params["dense_w"],
                        params["dense_b"], out_dtype=jnp.float32)
    return out.reshape(B, S, d_model), kvcache


# -----------------------------------------------------------------------------
# Main
# -----------------------------------------------------------------------------
if __name__ == "__main__":
    B, S, d_model, num_heads = 2, 8, 32, 4
    depth = d_model // num_heads

    key = jax.random.PRNGKey(0)
    kq, kk, kv, kp = jax.random.split(key, 4)
    q_in = jax.random.normal(kq, (B, S, d_model), jnp.float32)
    k_in = jax.random.normal(kk, (B, S, d_model), jnp.float32)
    v_in = jax.random.normal(kv, (B, S, d_model), jnp.float32)

    # look-ahead (causal) mask, 1.0 where attention is disallowed (API fidelity;
    # the kernel reproduces `logits + mask * -1e9` in-kernel)
    causal = 1.0 - jnp.tril(jnp.ones((S, S), jnp.float32))
    mask = causal[None, None, :, :]

    params = init_params(kp, d_model, num_heads)
    rope_tables = build_rope_tables(max_seq_len=4096, head_dim=depth, d_model=d_model)

    output, kvcache = plg_mha_forward(params, q_in, k_in, v_in, mask,
                                      num_heads, rope_tables)
    jax.block_until_ready(output)
    jax.block_until_ready(kvcache[0])
    jax.block_until_ready(kvcache[1])

    assert output.shape == (B, S, d_model)
    assert output.dtype == jnp.float32
    assert kvcache[0].shape == (B, S, num_heads, depth)
    assert kvcache[1].shape == (B, S, num_heads, depth)
    print("KERNEL_OK")
</pallas_src>

<mosaic_0001>
module attributes {stable_mosaic.version = 11 : i64} {
  func.func @_linear_rope_kernel(%arg0: i32, %arg1: i32, %arg2: i32, %arg3: memref<8x32xf32, #tpu.memory_space<vmem>>, %arg4: memref<32x32xbf16, #tpu.memory_space<vmem>>, %arg5: memref<1x32xf32, #tpu.memory_space<vmem>>, %arg6: memref<8x32xbf16, #tpu.memory_space<vmem>>, %arg7: memref<8x32xbf16, #tpu.memory_space<vmem>>, %arg8: memref<8x32xbf16, #tpu.memory_space<vmem>>, %arg9: memref<8x32xf32, #tpu.memory_space<vmem>>) attributes {dimension_semantics = [#tpu.dimension_semantics<parallel>, #tpu.dimension_semantics<parallel>, #tpu.dimension_semantics<arbitrary>], iteration_bounds = array<i64: 2, 1, 1>, scalar_prefetch = 0 : i64, scratch_operands = 1 : i64, tpu.core_type = #tpu.core_type<tc>, window_params = [{transform_indices = @transform_0, window_bounds = array<i64: 8, 32>}, {transform_indices = @transform_1, window_bounds = array<i64: 32, 32>}, {transform_indices = @transform_2, window_bounds = array<i64: 1, 32>}, {transform_indices = @transform_3, window_bounds = array<i64: 8, 32>}, {transform_indices = @transform_4, window_bounds = array<i64: 8, 32>}, {transform_indices = @transform_5, window_bounds = array<i64: 8, 32>}]} {
    %c0_i32 = arith.constant 0 : i32
    %0 = arith.cmpi eq, %arg2, %c0_i32 : i32
    %1 = arith.extui %0 : i1 to i32
    %c0_i32_0 = arith.constant 0 : i32
    %2 = arith.cmpi ne, %1, %c0_i32_0 : i32
    scf.if %2 {
      %cst_10 = arith.constant 0.000000e+00 : f32
      %13 = vector.broadcast %cst_10 : f32 to vector<8x32xf32>
      %c0_11 = arith.constant 0 : index
      %c0_12 = arith.constant 0 : index
      %14 = vector.load %arg9[%c0_11, %c0_12] : memref<8x32xf32, #tpu.memory_space<vmem>>, vector<8x32xf32>
      tpu.vector_store %arg9[%c0_11, %c0_12], %13 {strides = array<i32>} : memref<8x32xf32, #tpu.memory_space<vmem>>, vector<8x32xf32>,
    } else {
    }
    %c0 = arith.constant 0 : index
    %c0_1 = arith.constant 0 : index
    %3 = vector.load %arg9[%c0, %c0_1] : memref<8x32xf32, #tpu.memory_space<vmem>>, vector<8x32xf32>
    %c0_2 = arith.constant 0 : index
    %c0_3 = arith.constant 0 : index
    %4 = vector.load %arg3[%c0_2, %c0_3] : memref<8x32xf32, #tpu.memory_space<vmem>>, vector<8x32xf32>
    %5 = arith.truncf %4 : vector<8x32xf32> to vector<8x32xbf16>
    %c0_4 = arith.constant 0 : index
    %c0_5 = arith.constant 0 : index
    %6 = vector.load %arg4[%c0_4, %c0_5] : memref<32x32xbf16, #tpu.memory_space<vmem>>, vector<32x32xbf16>
    %cst = arith.constant dense<0.000000e+00> : vector<8x32xf32>
    %7 = tpu.matmul %5, %6, %cst {dimension_numbers = #tpu.dot_dimension_numbers<[1], [0], [0], [1], [0, 0, 1, 1], [], []>} : vector<8x32xbf16>, vector<32x32xbf16>, vector<8x32xf32> -> vector<8x32xf32>
    %8 = arith.addf %3, %7 : vector<8x32xf32>
    %c0_6 = arith.constant 0 : index
    %c0_7 = arith.constant 0 : index
    %9 = vector.load %arg9[%c0_6, %c0_7] : memref<8x32xf32, #tpu.memory_space<vmem>>, vector<8x32xf32>
    tpu.vector_store %arg9[%c0_6, %c0_7], %8 {strides = array<i32>} : memref<8x32xf32, #tpu.memory_space<vmem>>, vector<8x32xf32>,
    %c0_i32_8 = arith.constant 0 : i32
    %10 = arith.cmpi eq, %arg2, %c0_i32_8 : i32
    %11 = arith.extui %10 : i1 to i32
    %c0_i32_9 = arith.constant 0 : i32
    %12 = arith.cmpi ne, %11, %c0_i32_9 : i32
    scf.if %12 {
      %c0_10 = arith.constant 0 : index
      %c0_11 = arith.constant 0 : index
      %13 = vector.load %arg9[%c0_10, %c0_11] : memref<8x32xf32, #tpu.memory_space<vmem>>, vector<8x32xf32>
      %c0_12 = arith.constant 0 : index
      %c0_13 = arith.constant 0 : index
      %14 = vector.load %arg5[%c0_12, %c0_13] : memref<1x32xf32, #tpu.memory_space<vmem>>, vector<1x32xf32>
      %15 = vector.broadcast %14 : vector<1x32xf32> to vector<8x32xf32>
      %16 = arith.addf %13, %15 : vector<8x32xf32>
      %c31_i32 = arith.constant 31 : i32
      %17 = tpu.dynamic_rotate %16 by %c31_i32 dim 1 : vector<8x32xf32>, i32 -> vector<8x32xf32>
      %c1_i32 = arith.constant 1 : i32
      %18 = tpu.dynamic_rotate %16 by %c1_i32 dim 1 : vector<8x32xf32>, i32 -> vector<8x32xf32>
      %19 = tpu.iota {dimensions = array<i32: 1>} : vector<8x32xi32>
      %c2_i32 = arith.constant 2 : i32
      %c0_i32_14 = arith.constant 0 : i32
      %20 = arith.cmpi eq, %c2_i32, %c0_i32_14 : i32
      %c1_i32_15 = arith.constant 1 : i32
      %21 = arith.select %20, %c1_i32_15, %c2_i32 : i32
      %22 = vector.broadcast %21 : i32 to vector<8x32xi32>
      %23 = arith.remsi %19, %22 : vector<8x32xi32>
      %c0_i32_16 = arith.constant 0 : i32
      %24 = vector.broadcast %c0_i32_16 : i32 to vector<8x32xi32>
      %25 = arith.cmpi ne, %23, %24 : vector<8x32xi32>
      %c0_i32_17 = arith.constant 0 : i32
      %26 = vector.broadcast %c0_i32_17 : i32 to vector<8x32xi32>
      %27 = arith.cmpi slt, %23, %26 : vector<8x32xi32>
      %c0_i32_18 = arith.constant 0 : i32
      %28 = arith.cmpi slt, %21, %c0_i32_18 : i32
      %29 = vector.broadcast %28 : i1 to vector<8x32xi1>
      %30 = vector.broadcast %29 : vector<8x32xi1> to vector<8x32xi1>
      %31 = arith.xori %27, %30 : vector<8x32xi1>
      %32 = arith.andi %31, %25 : vector<8x32xi1>
      %33 = vector.broadcast %21 : i32 to vector<8x32xi32>
      %34 = arith.addi %23, %33 : vector<8x32xi32>
      %35 = arith.select %32, %34, %23 : vector<8x32xi1>, vector<8x32xi32>
      %c0_i32_19 = arith.constant 0 : i32
      %36 = vector.broadcast %c0_i32_19 : i32 to vector<8x32xi32>
      %37 = arith.cmpi eq, %35, %36 : vector<8x32xi32>
      %38 = arith.select %37, %17, %18 : vector<8x32xi1>, vector<8x32xf32>
      %c0_20 = arith.constant 0 : index
      %c0_21 = arith.constant 0 : index
      %39 = vector.load %arg6[%c0_20, %c0_21] : memref<8x32xbf16, #tpu.memory_space<vmem>>, vector<8x32xbf16>
      %40 = arith.extf %39 : vector<8x32xbf16> to vector<8x32xf32>
      %41 = arith.mulf %16, %40 : vector<8x32xf32>
      %c0_22 = arith.constant 0 : index
      %c0_23 = arith.constant 0 : index
      %42 = vector.load %arg7[%c0_22, %c0_23] : memref<8x32xbf16, #tpu.memory_space<vmem>>, vector<8x32xbf16>
      %43 = arith.extf %42 : vector<8x32xbf16> to vector<8x32xf32>
      %44 = arith.mulf %38, %43 : vector<8x32xf32>
      %45 = arith.addf %41, %44 : vector<8x32xf32>
      %46 = arith.truncf %45 : vector<8x32xf32> to vector<8x32xbf16>
      %c0_24 = arith.constant 0 : index
      %c0_25 = arith.constant 0 : index
      %47 = vector.load %arg8[%c0_24, %c0_25] : memref<8x32xbf16, #tpu.memory_space<vmem>>, vector<8x32xbf16>
      tpu.vector_store %arg8[%c0_24, %c0_25], %46 {strides = array<i32>} : memref<8x32xbf16, #tpu.memory_space<vmem>>, vector<8x32xbf16>,
    } else {
    }
    return
  }
  func.func @transform_0(%arg0: i32, %arg1: i32, %arg2: i32) -> (i32, i32) {
    %c0_i32 = arith.constant 0 : i32
    return %arg0, %arg2 : i32, i32
  }
  func.func @transform_1(%arg0: i32, %arg1: i32, %arg2: i32) -> (i32, i32) {
    %c0_i32 = arith.constant 0 : i32
    return %arg2, %arg1 : i32, i32
  }
  func.func @transform_2(%arg0: i32, %arg1: i32, %arg2: i32) -> (i32, i32) {
    %c0_i32 = arith.constant 0 : i32
    %c0_i32_0 = arith.constant 0 : i32
    return %c0_i32, %arg1 : i32, i32
  }
  func.func @transform_3(%arg0: i32, %arg1: i32, %arg2: i32) -> (i32, i32) {
    %c1_i32 = arith.constant 1 : i32
    %c0_i32 = arith.constant 0 : i32
    %0 = arith.cmpi eq, %c1_i32, %c0_i32 : i32
    %c1_i32_0 = arith.constant 1 : i32
    %1 = arith.select %0, %c1_i32_0, %c1_i32 : i32
    %2 = arith.remsi %arg0, %1 : i32
    %c0_i32_1 = arith.constant 0 : i32
    %3 = arith.cmpi ne, %2, %c0_i32_1 : i32
    %c0_i32_2 = arith.constant 0 : i32
    %4 = arith.cmpi slt, %2, %c0_i32_2 : i32
    %c0_i32_3 = arith.constant 0 : i32
    %5 = arith.cmpi slt, %1, %c0_i32_3 : i32
    %6 = arith.xori %4, %5 : i1
    %7 = arith.andi %6, %3 : i1
    %8 = arith.addi %2, %1 : i32
    %9 = arith.select %7, %8, %2 : i32
    %c0_i32_4 = arith.constant 0 : i32
    return %9, %arg1 : i32, i32
  }
  func.func @transform_4(%arg0: i32, %arg1: i32, %arg2: i32) -> (i32, i32) {
    %c1_i32 = arith.constant 1 : i32
    %c0_i32 = arith.constant 0 : i32
    %0 = arith.cmpi eq, %c1_i32, %c0_i32 : i32
    %c1_i32_0 = arith.constant 1 : i32
    %1 = arith.select %0, %c1_i32_0, %c1_i32 : i32
    %2 = arith.remsi %arg0, %1 : i32
    %c0_i32_1 = arith.constant 0 : i32
    %3 = arith.cmpi ne, %2, %c0_i32_1 : i32
    %c0_i32_2 = arith.constant 0 : i32
    %4 = arith.cmpi slt, %2, %c0_i32_2 : i32
    %c0_i32_3 = arith.constant 0 : i32
    %5 = arith.cmpi slt, %1, %c0_i32_3 : i32
    %6 = arith.xori %4, %5 : i1
    %7 = arith.andi %6, %3 : i1
    %8 = arith.addi %2, %1 : i32
    %9 = arith.select %7, %8, %2 : i32
    %c0_i32_4 = arith.constant 0 : i32
    return %9, %arg1 : i32, i32
  }
  func.func @transform_5(%arg0: i32, %arg1: i32, %arg2: i32) -> (i32, i32) {
    %c0_i32 = arith.constant 0 : i32
    return %arg0, %arg1 : i32, i32
  }
}

</mosaic_0001>

<llo_original>
// kernel: tpu_custom_call.1
$region0: #{tpu_custom_call.1}
  #allocation0 [shape = 'u32[]', space=smem, size = 0x4, offset = 0x4, fixed_abs, tag = 'smem constant byte address 0x4 - core index']
  #allocation1 [shape = 'u32[72,128]{1,0:T(1,128)}', space=vmem, size = 0x9000, scoped, tag = 'internal scratch']
  #allocation2 [shape = 'f32[8,32]{1,0:T(8,128)}', space=vmem, size = 0x1000, scoped, tag = 'scratch operand']
  %s0 = inlined_call_operand.vmem [shape: f32[16,32], index: 0, kind: input, shape index: {}]
  %s1 = inlined_call_operand.vmem [shape: bf16[32,32], index: 1, kind: input, shape index: {}]
  %s2 = inlined_call_operand.vmem [shape: f32[1,32], index: 2, kind: input, shape index: {}]
  %s3 = inlined_call_operand.vmem [shape: bf16[4096,32], index: 3, kind: input, shape index: {}]
  %s4 = inlined_call_operand.vmem [shape: bf16[4096,32], index: 4, kind: input, shape index: {}]
  %s5 = inlined_call_operand.hbm [shape: bf16[16,32], index: 5, kind: output, shape index: {}]
  %s6 = sld [smem:[#allocation0]]
  $region61: #{tpu_custom_call.1} parent=0
    _
  %s8 = ssub.s32 1, %s6
  %s9 = scalar_select 0, %s8, %s6
  $region1: #{tpu_custom_call.1} parent=0
    #allocation3 [shape = 'u8[4096]{0}', space=vmem, size = 0x1000, scoped, tag = 'output window, operand 0']
    #allocation4 [shape = 's32[2]{0}', space=sflag, size = 0x8, scoped, tag = 'scoped memory for tpu_custom_call.1']
    %10 = vsyncpa [#allocation4], 0
    %s11 = scalar_lea.sflag [#allocation4], 1
    %12 = vsyncpa %s11, 0
    loop: start=0, step=1, limit=4
    $region2: #{tpu_custom_call.1} parent=1 // loop_pre_header
      _
    $region3: #{tpu_custom_call.1} parent=1 // loop_header
      %s14 = sphi 0, %s18
      %p15 = scmp.ge.s32.totalorder %s14, 4
      %s21 = sphi 0, %s40
      %s22 = sphi 0, %s36
      %s23 = sphi 0, %s32
      %s24 = sphi 0, %s21
      %s25 = sphi 0, %s22
      %s26 = sphi 0, %s23
      %s27 = sphi 0, %s24
      %s28 = sphi 0, %s25
      %s29 = sphi 0, %s26
      %s45 = sphi 0, %s47
      %s48 = sphi 0, %s45
      %s49 = sphi 0, %s48
      %s65 = sphi 0, %s49
      %s73 = sphi 0, %s75
      %s76 = sphi 0, %s73
      %s77 = sphi 0, %s76
      %s93 = sphi 0, %s77
      %s99 = sphi 0, %s101
      %s102 = sphi 0, %s99
      %s103 = sphi 0, %s102
      %s119 = sphi 0, %s103
      %s125 = sphi 0, %s127
      %s128 = sphi 0, %s125
      %s129 = sphi 0, %s128
      %s145 = sphi 0, %s129
      %s151 = sphi 0, %s153
      %s154 = sphi 0, %s151
      %s155 = sphi 0, %s154
      %s171 = sphi 0, %s155
      %s179 = sphi 0, %s181
      %s182 = sphi 0, %s179
      %s183 = sphi 0, %s182
      %s199 = sphi 0, %s183
    $region4: #{tpu_custom_call.1} parent=1 // loop_header_branch
      %17 = sbr.rel (%p15) target = $region8
    $region5: #{tpu_custom_call.1} parent=1 // loop_body
      %s19 = ssub.s32 %s14, 1
      %s20 = ssub.s32 %s14, 2
      %s30 = sadd.s32 1, %s23
      %p31 = scmp.ge.s32.totalorder %s30, 1
      %s32 = scalar_select %p31, 0, %s30
      %s33 = sadd.s32 1, %s22
      %s34 = scalar_select %p31, %s33, %s22
      %p35 = scmp.ge.s32.totalorder %s34, 1
      %s36 = scalar_select %p35, 0, %s34
      %s37 = sadd.s32 1, %s21
      %s38 = scalar_select %p35, %s37, %s21
      %p39 = scmp.ge.s32.totalorder %s38, 2
      %s40 = scalar_select %p39, 0, %s38
      %s41 = ssub.s32 %s21, %s40
      %s42 = ssub.s32 %s23, %s32
      %s43 = sor.u32 %s41, %s42
      %p44 = scmp.eq.s32.totalorder %s43, 0
      %s46 = sadd.s32 %s45, 1
      %s47 = scalar_select %p44, %s45, %s46
      %p50 = pneg %p44
      %p51 = scmp.eq.s32.totalorder %s14, 1
      %p52 = por %p50, %p51
      %p53 = scmp.ne.s32.totalorder %s45, %s48
      %p54 = scmp.eq.s32.totalorder %s14, 0
      %p55 = por %p53, %p54
      %p56 = scmp.ne.s32.totalorder %s45, %s48
      %p57 = scmp.eq.s32.totalorder %s19, 1
      %p58 = por %p56, %p57
      %p59 = scmp.ne.s32.totalorder %s48, %s49
      %p60 = scmp.eq.s32.totalorder %s19, 0
      %p61 = por %p59, %p60
      %p62 = scmp.ne.s32.totalorder %s48, %s49
      %p63 = scmp.eq.s32.totalorder %s20, 1
      %p64 = por %p62, %p63
      %p66 = scmp.ne.s32.totalorder %s49, %s65
      %p67 = scmp.eq.s32.totalorder %s20, 0
      %p68 = por %p66, %p67
      %s69 = ssub.s32 %s23, %s32
      %s70 = ssub.s32 %s22, %s36
      %s71 = sor.u32 %s69, %s70
      %p72 = scmp.eq.s32.totalorder %s71, 0
      %s74 = sadd.s32 %s73, 1
      %s75 = scalar_select %p72, %s73, %s74
      %p78 = pneg %p72
      %p79 = scmp.eq.s32.totalorder %s14, 1
      %p80 = por %p78, %p79
      %p81 = scmp.ne.s32.totalorder %s73, %s76
      %p82 = scmp.eq.s32.totalorder %s14, 0
      %p83 = por %p81, %p82
      %p84 = scmp.ne.s32.totalorder %s73, %s76
      %p85 = scmp.eq.s32.totalorder %s19, 1
      %p86 = por %p84, %p85
      %p87 = scmp.ne.s32.totalorder %s76, %s77
      %p88 = scmp.eq.s32.totalorder %s19, 0
      %p89 = por %p87, %p88
      %p90 = scmp.ne.s32.totalorder %s76, %s77
      %p91 = scmp.eq.s32.totalorder %s20, 1
      %p92 = por %p90, %p91
      %p94 = scmp.ne.s32.totalorder %s77, %s93
      %p95 = scmp.eq.s32.totalorder %s20, 0
      %p96 = por %p94, %p95
      %s97 = ssub.s32 %s22, %s36
      %p98 = scmp.eq.s32.totalorder %s97, 0
      %s100 = sadd.s32 %s99, 1
      %s101 = scalar_select %p98, %s99, %s100
      %p104 = pneg %p98
      %p105 = scmp.eq.s32.totalorder %s14, 1
      %p106 = por %p104, %p105
      %p107 = scmp.ne.s32.totalorder %s99, %s102
      %p108 = scmp.eq.s32.totalorder %s14, 0
      %p109 = por %p107, %p108
      %p110 = scmp.ne.s32.totalorder %s99, %s102
      %p111 = scmp.eq.s32.totalorder %s19, 1
      %p112 = por %p110, %p111
      %p113 = scmp.ne.s32.totalorder %s102, %s103
      %p114 = scmp.eq.s32.totalorder %s19, 0
      %p115 = por %p113, %p114
      %p116 = scmp.ne.s32.totalorder %s102, %s103
      %p117 = scmp.eq.s32.totalorder %s20, 1
      %p118 = por %p116, %p117
      %p120 = scmp.ne.s32.totalorder %s103, %s119
      %p121 = scmp.eq.s32.totalorder %s20, 0
      %p122 = por %p120, %p121
      %s123 = ssub.s32 %s22, %s36
      %p124 = scmp.eq.s32.totalorder %s123, 0
      %s126 = sadd.s32 %s125, 1
      %s127 = scalar_select %p124, %s125, %s126
      %p130 = pneg %p124
      %p131 = scmp.eq.s32.totalorder %s14, 1
      %p132 = por %p130, %p131
      %p133 = scmp.ne.s32.totalorder %s125, %s128
      %p134 = scmp.eq.s32.totalorder %s14, 0
      %p135 = por %p133, %p134
      %p136 = scmp.ne.s32.totalorder %s125, %s128
      %p137 = scmp.eq.s32.totalorder %s19, 1
      %p138 = por %p136, %p137
      %p139 = scmp.ne.s32.totalorder %s128, %s129
      %p140 = scmp.eq.s32.totalorder %s19, 0
      %p141 = por %p139, %p140
      %p142 = scmp.ne.s32.totalorder %s128, %s129
      %p143 = scmp.eq.s32.totalorder %s20, 1
      %p144 = por %p142, %p143
      %p146 = scmp.ne.s32.totalorder %s129, %s145
      %p147 = scmp.eq.s32.totalorder %s20, 0
      %p148 = por %p146, %p147
      %s149 = ssub.s32 %s22, %s36
      %p150 = scmp.eq.s32.totalorder %s149, 0
      %s152 = sadd.s32 %s151, 1
      %s153 = scalar_select %p150, %s151, %s152
      %p156 = pneg %p150
      %p157 = scmp.eq.s32.totalorder %s14, 1
      %p158 = por %p156, %p157
      %p159 = scmp.ne.s32.totalorder %s151, %s154
      %p160 = scmp.eq.s32.totalorder %s14, 0
      %p161 = por %p159, %p160
      %p162 = scmp.ne.s32.totalorder %s151, %s154
      %p163 = scmp.eq.s32.totalorder %s19, 1
      %p164 = por %p162, %p163
      %p165 = scmp.ne.s32.totalorder %s154, %s155
      %p166 = scmp.eq.s32.totalorder %s19, 0
      %p167 = por %p165, %p166
      %p168 = scmp.ne.s32.totalorder %s154, %s155
      %p169 = scmp.eq.s32.totalorder %s20, 1
      %p170 = por %p168, %p169
      %p172 = scmp.ne.s32.totalorder %s155, %s171
      %p173 = scmp.eq.s32.totalorder %s20, 0
      %p174 = por %p172, %p173
      %s175 = ssub.s32 %s21, %s40
      %s176 = ssub.s32 %s22, %s36
      %s177 = sor.u32 %s175, %s176
      %p178 = scmp.eq.s32.totalorder %s177, 0
      %s180 = sadd.s32 %s179, 1
      %s181 = scalar_select %p178, %s179, %s180
      %p184 = pneg %p178
      %p185 = scmp.eq.s32.totalorder %s14, 1
      %p186 = por %p184, %p185
      %p187 = scmp.ne.s32.totalorder %s179, %s182
      %p188 = scmp.eq.s32.totalorder %s14, 0
      %p189 = por %p187, %p188
      %p190 = scmp.ne.s32.totalorder %s179, %s182
      %p191 = scmp.eq.s32.totalorder %s19, 1
      %p192 = por %p190, %p191
      %p193 = scmp.ne.s32.totalorder %s182, %s183
      %p194 = scmp.eq.s32.totalorder %s19, 0
      %p195 = por %p193, %p194
      %p196 = scmp.ne.s32.totalorder %s182, %s183
      %p197 = scmp.eq.s32.totalorder %s20, 1
      %p198 = por %p196, %p197
      %p200 = scmp.ne.s32.totalorder %s183, %s199
      %p201 = scmp.eq.s32.totalorder %s20, 0
      %p202 = por %p200, %p201
      %p203 = scmp.le.s32.totalorder 1, %s14
      %p204 = scmp.lt.s32.totalorder %s14, 3
      %p205 = pnand %p203, %p204
      %p206 = pneg %p205
      // Predicated region
      $region9: #{tpu_custom_call.1} parent=5 // pred_check
        _
      $region10: #{tpu_custom_call.1} parent=5 // pred_check_branch
        %208 = sbr.rel (%p205) target = $region12
      $region11: #{tpu_custom_call.1} parent=5 // pred_region
        %s209 = ssub.s32 %s14, 1
        // Predicated region
        $region13: #{tpu_custom_call.1} parent=11 // pred_check
          %p210 = pneg %p89
        $region14: #{tpu_custom_call.1} parent=11 // pred_check_branch
          %212 = sbr.rel (%p210) target = $region16
        $region15: #{tpu_custom_call.1} parent=11 // pred_region
          %s213 = smul.u32 4, %s26
          %p214 = scmp.lt.s32.totalorder %s213, 3
          %s215 = scalar_select %p214, %s213, 3
          %p216 = scmp.lt.s32.totalorder %s25, 0
          %s217 = scalar_select %p216, %s25, 0
          %s218 = sadd.s32 %s217, %s215
          %s219 = smul.addr %s218, 4
          %s220 = scalar_lea.vmem %s1, %s219
          %s221 = smul.u32 4, %s26
        $region16: #{tpu_custom_call.1} parent=11 // pred_fallthru
          _
        // Predicated region
        $region17: #{tpu_custom_call.1} parent=11 // pred_check
          %p222 = pneg %p115
        $region18: #{tpu_custom_call.1} parent=11 // pred_check_branch
          %224 = sbr.rel (%p222) target = $region20
        $region19: #{tpu_custom_call.1} parent=11 // pred_region
          %p225 = scmp.lt.s32.totalorder %s25, 0
          %s226 = scalar_select %p225, %s25, 0
          %s227 = scalar_lea.vmem %s2, %s226
        $region20: #{tpu_custom_call.1} parent=11 // pred_fallthru
          _
        // Predicated region
        $region21: #{tpu_custom_call.1} parent=11 // pred_check
          %p228 = pneg %p141
        $region22: #{tpu_custom_call.1} parent=11 // pred_check_branch
          %230 = sbr.rel (%p228) target = $region24
        $region23: #{tpu_custom_call.1} parent=11 // pred_region
          %p231 = scmp.lt.s32.totalorder %s25, 0
          %s232 = scalar_select %p231, %s25, 0
          %s233 = smul.addr %s232, 4
          %s234 = scalar_lea.vmem %s3, %s233
        $region24: #{tpu_custom_call.1} parent=11 // pred_fallthru
          _
        // Predicated region
        $region25: #{tpu_custom_call.1} parent=11 // pred_check
          %p235 = pneg %p167
        $region26: #{tpu_custom_call.1} parent=11 // pred_check_branch
          %237 = sbr.rel (%p235) target = $region28
        $region27: #{tpu_custom_call.1} parent=11 // pred_region
          %p238 = scmp.lt.s32.totalorder %s25, 0
          %s239 = scalar_select %p238, %s25, 0
          %s240 = smul.addr %s239, 4
          %s241 = scalar_lea.vmem %s4, %s240
        $region28: #{tpu_custom_call.1} parent=11 // pred_fallthru
          _
      $region12: #{tpu_custom_call.1} parent=5 // pred_fallthru
        _
      %p242 = scmp.lt.s32.totalorder %s14, 2
      // Predicated region
      $region29: #{tpu_custom_call.1} parent=5 // pred_check
        %p243 = pneg %p242
      $region30: #{tpu_custom_call.1} parent=5 // pred_check_branch
        %245 = sbr.rel (%p243) target = $region32
      $region31: #{tpu_custom_call.1} parent=5 // pred_region
        // Predicated region
        $region33: #{tpu_custom_call.1} parent=31 // pred_check
          %p246 = pneg %p55
        $region34: #{tpu_custom_call.1} parent=31 // pred_check_branch
          %248 = sbr.rel (%p246) target = $region36
        $region35: #{tpu_custom_call.1} parent=31 // pred_region
          %p249 = scmp.lt.s32.totalorder %s21, 1
          %s250 = scalar_select %p249, %s21, 1
          %p251 = scmp.lt.s32.totalorder %s23, 0
          %s252 = scalar_select %p251, %s23, 0
          %s253 = sadd.s32 %s252, %s250
          %s254 = smul.addr %s253, 8
          %s255 = scalar_lea.vmem %s0, %s254
        $region36: #{tpu_custom_call.1} parent=31 // pred_fallthru
          _
      $region32: #{tpu_custom_call.1} parent=5 // pred_fallthru
        _
      %p256 = scmp.le.s32.totalorder 1, %s14
      %p257 = scmp.lt.s32.totalorder %s14, 3
      %p258 = pnand %p256, %p257
      %p259 = pneg %p258
      // Predicated region
      $region37: #{tpu_custom_call.1} parent=5 // pred_check
        _
      $region38: #{tpu_custom_call.1} parent=5 // pred_check_branch
        %261 = sbr.rel (%p258) target = $region40
      $region39: #{tpu_custom_call.1} parent=5 // pred_region
        %s262 = ssub.s32 %s14, 1
        %p263 = scmp.lt.s32.totalorder %s24, 1
        %s264 = scalar_select %p263, %s24, 1
        %p265 = scmp.lt.s32.totalorder %s26, 0
        %s266 = scalar_select %p265, %s26, 0
        %s267 = sadd.s32 %s266, %s264
        %s268 = smul.addr %s267, 8
        %s269 = scalar_lea.vmem %s0, %s268
        %p270 = pneg %p61
        %p271 = pneg %p58
        %s272 = smul.u32 4, %s26
        %p273 = scmp.lt.s32.totalorder %s272, 3
        %s274 = scalar_select %p273, %s272, 3
        %p275 = scmp.lt.s32.totalorder %s25, 0
        %s276 = scalar_select %p275, %s25, 0
        %s277 = sadd.s32 %s276, %s274
        %s278 = smul.addr %s277, 4
        %s279 = scalar_lea.vmem %s1, %s278
        %p280 = pneg %p89
        %p281 = pneg %p86
        %p282 = scmp.lt.s32.totalorder %s25, 0
        %s283 = scalar_select %p282, %s25, 0
        %s284 = scalar_lea.vmem %s2, %s283
        %p285 = pneg %p115
        %p286 = pneg %p112
        %p287 = scmp.lt.s32.totalorder %s25, 0
        %s288 = scalar_select %p287, %s25, 0
        %s289 = smul.addr %s288, 4
        %s290 = scalar_lea.vmem %s3, %s289
        %p291 = pneg %p141
        %p292 = pneg %p138
        %p293 = scmp.lt.s32.totalorder %s25, 0
        %s294 = scalar_select %p293, %s25, 0
        %s295 = smul.addr %s294, 4
        %s296 = scalar_lea.vmem %s4, %s295
        %p297 = pneg %p167
        %p298 = pneg %p164
        %p299 = pneg %p195
        %p300 = pneg %p192
        %s301 = sand.u32 %s182, 1
        %s302 = scalar_lea.sflag [#allocation4], %s301
        %s303 = sand.u32 %s182, 1
        %s304 = smul.addr %s303, 4
        %s305 = scalar_lea.vmem [#allocation3], %s304
        %p306 = scmp.lt.s32.totalorder %s24, 1
        %s307 = scalar_select %p306, %s24, 1
        %p308 = scmp.lt.s32.totalorder %s26, 0
        %s309 = scalar_select %p308, %s26, 0
        %s310 = sadd.s32 %s309, %s307
        %s311 = smul.addr %s310, 8
        %s312 = scalar_lea.vmem %s0, %s311
        %s313 = smul.u32 4, %s26
        %p314 = scmp.lt.s32.totalorder %s313, 3
        %s315 = scalar_select %p314, %s313, 3
        %p316 = scmp.lt.s32.totalorder %s25, 0
        %s317 = scalar_select %p316, %s25, 0
        %s318 = sadd.s32 %s317, %s315
        %s319 = smul.addr %s318, 4
        %s320 = scalar_lea.vmem %s1, %s319
        %s321 = smul.u32 4, %s26
        %p322 = scmp.lt.s32.totalorder %s25, 0
        %s323 = scalar_select %p322, %s25, 0
        %s324 = scalar_lea.vmem %s2, %s323
        %p325 = scmp.lt.s32.totalorder %s25, 0
        %s326 = scalar_select %p325, %s25, 0
        %s327 = smul.addr %s326, 4
        %s328 = scalar_lea.vmem %s3, %s327
        %p329 = scmp.lt.s32.totalorder %s25, 0
        %s330 = scalar_select %p329, %s25, 0
        %s331 = smul.addr %s330, 4
        %s332 = scalar_lea.vmem %s4, %s331
        %p334 = scmp.eq.s32.totalorder %s26, 0
        // Predicated region
        $region41: #{tpu_custom_call.1} parent=39 // pred_check
          %p335 = pneg %p334
        $region42: #{tpu_custom_call.1} parent=39 // pred_check_branch
          %337 = sbr.rel (%p335) target = $region44
        $region43: #{tpu_custom_call.1} parent=39 // pred_region
          %vm338 = vcmask 261120
          %339 = vst.msk [vmem:[#allocation2] sm:$0xff] %vm338, 0.0
        $region44: #{tpu_custom_call.1} parent=39 // pred_fallthru
          _
        %v340 = vld [vmem:[#allocation2] sm:$0xff]
        %v341 = vld [vmem:[%s312] sm:$0xff]
        %v342 = vpack.c.bf16 %v341, %v341
        %v343 = vld [vmem:[%s320] sm:$0xf]
        %v344 = vld [vmem:[%s320 + $0x4] sm:$0xf]
        %v345 = vld [vmem:[%s320 + $0x8] sm:$0xf]
        %v346 = vld [vmem:[%s320 + $0xc] sm:$0xf]
        %v351 = vunpack.c.l.b16 %v343
        %v352 = vunpack.c.l.b16 %v344
        %v353 = vunpack.c.l.b16 %v345
        %v354 = vunpack.c.l.b16 %v346
        %v355 = vpack.c.b16 %v352, %v351
        %v356 = vpack.c.b16 %v354, %v353
        %vm359 = vcmask 261120
        %v361 = vsel %vm359, %v342, 0
        %363 = vmatpush.bf16.msra.mxu0 0
        %364 = vmatpush.bf16.msra.mxu0 0
        %365 = vmatpush.bf16.msra.mxu0 0
        %366 = vmatpush.bf16.msra.mxu0 0
        %367 = vmatpush.bf16.msra.mxu0 0
        %368 = vmatpush.bf16.msra.mxu0 0
        %369 = vmatpush.bf16.msra.mxu0 %v356
        %370 = vmatpush.bf16.msra.mxu0 %v355
        %371 = vmatmul.bf16.gmra.mxu0 %v361
        %v372 = vpop.f32.mrf.mxu0
        %v373 = vadd.f32 0.0, %v372
        %v374 = vpop.f32.mrf.mxu0
        %375 = vdwg.mxu0
        %v376 = vadd.f32 %v340, %v373
        %377 = vst.msk [vmem:[#allocation2] sm:$0xff] %vm359, %v376
        // Predicated region
        $region45: #{tpu_custom_call.1} parent=39 // pred_check
          %p378 = pneg %p334
        $region46: #{tpu_custom_call.1} parent=39 // pred_check_branch
          %380 = sbr.rel (%p378) target = $region48
        $region47: #{tpu_custom_call.1} parent=39 // pred_region
          %v381 = vld [vmem:[#allocation2] sm:$0xff]
          %v382 = vld [vmem:[%s324] sm:$0x1]
          %v384 = vperm.slane %v382, 0
          %v386 = vadd.f32 %v381, %v384
          %vm387 = vcmask 1047808
          %388 = vrot.lane.b32.xlu0 %v386, 32
          %v389 = vpop.permute.xlu0 %388
          %v390 = vsel %vm387, %v389, %v386
          %391 = vrot.lane.b32.xlu0 %v390, 32
          %v392 = vpop.permute.xlu0 %391
          %v393 = vsel %vm387, %v392, %v386
          %v394 = vlaneseq
          %v395 = vand.u32 %v394, 127
          %vm396 = vcmp.lt.s32.totalorder %v395, 0
          %v397 = vsub.s32 0, %v395
          %v398 = vsel %vm396, %v397, %v395
          %v399 = vshrl.u32 %v398, 1
          %v400 = vand.u32 %v398, 1
          %v401 = vsub.s32 0, %v400
          %v402 = vsel %vm396, %v401, %v400
          %vm403 = vcmp.ne.s32.totalorder %v402, 0
          %vm404 = vcmp.lt.s32.totalorder %v402, 0
          %vm405 = vmand %vm404, %vm403
          %v406 = vadd.s32 %v402, 2
          %v407 = vsel %vm405, %v406, %v402
          %vm408 = vcmp.eq.s32.totalorder %v407, 0
          %410 = vrot.lane.b32.xlu0 %v393, 127
          %v411 = vpop.permute.xlu0 %410
          %413 = vrot.lane.b32.xlu0 %v393, 97
          %v414 = vpop.permute.xlu0 %413
          %v416 = vsel %vm408, %v411, %v414
          %v417 = vld [vmem:[%s328] sm:$0xf]
          %v418 = vunpack.c.l.bf16 %v417
          %v419 = vmul.f32 %v386, %v418
          %v420 = vld [vmem:[%s332] sm:$0xf]
          %v421 = vunpack.c.l.bf16 %v420
          %v422 = vmul.f32 %v416, %v421
          %v423 = vadd.f32 %v419, %v422
          %v424 = vpack.c.bf16 %v423, %v423
          %vm425 = vcmask 257024
          %426 = vst.msk [vmem:[%s305] sm:$0xf] %vm425, %v424
        $region48: #{tpu_custom_call.1} parent=39 // pred_fallthru
          _
        %s427 = sand.u32 %s182, 1
        %s428 = scalar_lea.sflag [#allocation4], %s427
        %s429 = sand.u32 %s182, 1
        %s430 = smul.addr %s429, 4
        %s431 = scalar_lea.vmem [#allocation3], %s430
        // Predicated region
        $region49: #{tpu_custom_call.1} parent=39 // pred_check
          %p432 = pneg %p192
        $region50: #{tpu_custom_call.1} parent=39 // pred_check_branch
          %434 = sbr.rel (%p432) target = $region52
        $region51: #{tpu_custom_call.1} parent=39 // pred_region
          %436 = vsyncadd %s428, 0
          %s437 = sadd.s32 %s25, %s24
          %s438 = smul.addr %s437, 4
          %s439 = scalar_lea.hbm %s5, %s438
          %s441 = sshll.u32 %s431, 4
          %s442 = int_to_ptr.vmem [resolvable:$true] %s441
          %s443 = sshll.u32 %s439, 4
          %s444 = int_to_ptr.hbm [resolvable:$true] %s443
          %446 = dma.vmem_to_hbm [thread:$0]  %s442, 64, %s444, %s428
        $region52: #{tpu_custom_call.1} parent=39 // pred_fallthru
          _
      $region40: #{tpu_custom_call.1} parent=5 // pred_fallthru
        _
      %p447 = scmp.le.s32.totalorder 2, %s14
      // Predicated region
      $region53: #{tpu_custom_call.1} parent=5 // pred_check
        %p448 = pneg %p447
      $region54: #{tpu_custom_call.1} parent=5 // pred_check_branch
        %450 = sbr.rel (%p448) target = $region56
      $region55: #{tpu_custom_call.1} parent=5 // pred_region
        %s451 = ssub.s32 %s14, 2
        // Predicated region
        $region57: #{tpu_custom_call.1} parent=55 // pred_check
          %p452 = pneg %p198
        $region58: #{tpu_custom_call.1} parent=55 // pred_check_branch
          %454 = sbr.rel (%p452) target = $region60
        $region59: #{tpu_custom_call.1} parent=55 // pred_region
          %s455 = sand.u32 %s183, 1
          %s456 = scalar_lea.sflag [#allocation4], %s455
          %s457 = sand.u32 %s183, 1
          %s458 = smul.addr %s457, 4
          %s459 = scalar_lea.vmem [#allocation3], %s458
          %461 = dma.done %s456, 64
        $region60: #{tpu_custom_call.1} parent=55 // pred_fallthru
          _
      $region56: #{tpu_custom_call.1} parent=5 // pred_fallthru
        _
    $region6: #{tpu_custom_call.1} parent=1 // loop_footer
      %s18 = sadd.s32 1, %s14
    $region7: #{tpu_custom_call.1} parent=1 // loop_footer_branch
      %13 = sbr.rel target = $region3
    $region8: #{tpu_custom_call.1} parent=1 // loop_exit
      _
    %462 = vsyncpa [#allocation4], 1
    %s463 = scalar_lea.sflag [#allocation4], 1
    %464 = vsyncpa %s463, 1

</llo_original>
